<compile_context>
chip_gen: v7x
topology: tpu7x:2x2x1
jax: 0.10.0
libtpu: 0.0.40
codegen_flags: <defaults>
</compile_context>

<pallas_src>
import math

import jax
import jax.numpy as jnp
from jax.experimental import pallas as pl
from jax.experimental.pallas import tpu as pltpu


def _pair(v):
    if isinstance(v, (tuple, list)):
        assert len(v) == 2
        return tuple(int(i) for i in v)
    return (int(v), int(v))


def _round_up(a, b):
    return ((a + b - 1) // b) * b


def _vmem_capacity_bytes():
    try:
        return int(pltpu.get_tpu_info().vmem_capacity_bytes)
    except Exception:
        return 128 * 1024 * 1024   # v5e/v6e default


# --------------------------------------------------------------------------
# Pallas kernel: grouped (COG x CK) . (CK x TP) matmul + bias on the MXU
# --------------------------------------------------------------------------
def _mdcn_kernel(v_ref, w_ref, b_ref, out_ref):
    # v_ref   : (1, 1, CK, TP)  pre-weighted, pre-summed im2col columns
    # w_ref   : (1, COG, CK)    weights of this group
    # b_ref   : (1, COG, 1)     bias of this group (f32)
    # out_ref : (1, 1, COG, TP) f32 output tile
    acc = jnp.dot(w_ref[0], v_ref[0, 0], preferred_element_type=jnp.float32)
    out_ref[0, 0] = (acc + b_ref[0]).astype(out_ref.dtype)


# --------------------------------------------------------------------------
# Tile sizing helpers (generation-aware)
# --------------------------------------------------------------------------
def _choose_tile_p(P, cig_k_pad, cog, v_itemsize, capacity):
    """Largest multiple-of-128 pixel tile fitting ~1/3 of this chip's VMEM."""
    budget = max(capacity // 3, 16 << 20)          # ~42 MiB v5e/v6e, ~21 MiB v7x
    per_col = (2 * cig_k_pad * v_itemsize          # V block, double-buffered
               + 2 * cog * 4)                      # f32 output block, double-buffered
    tile = (budget // per_col) // 128 * 128
    tile = max(tile, 128)
    tile = min(tile, 16384)                        # keep descriptors / unroll sane
    tile = min(tile, _round_up(P, 128))
    return int(tile)


def _vmem_limit_bytes(tile_p, cig_k_pad, cog, v_itemsize, capacity):
    need = (2 * cig_k_pad * tile_p * v_itemsize        # V, double-buffered
            + 2 * cog * tile_p * 4                     # output, double-buffered
            + 2 * cog * cig_k_pad * v_itemsize         # weight
            + 2 * _round_up(cog, 8) * 128 * 4          # bias (lane-padded)
            + (8 << 20))                               # Mosaic internal headroom
    hi = max(capacity - (16 << 20), capacity * 3 // 4)  # 112 MiB v5e/v6e, 48 MiB v7x
    return int(max(min(max(need, 32 << 20), hi), need))


# --------------------------------------------------------------------------
# JAX glue: deformable im2col (bilinear gather), weights/mask folded & pre-summed
# --------------------------------------------------------------------------
def _build_weighted_columns(x, offset, mask, kernel_size, stride, padding,
                            dilation, groups, deformable_groups,
                            cig_k_pad, p_pad, compute_dtype):
    """Returns V: (N, groups, cig_k_pad, p_pad) in compute_dtype.

    V holds the mask-modulated im2col columns: the 4 bilinear corner values
    are gathered, weighted (bilinear weight * OOB zeroing * modulation mask)
    and summed in f32, then cast once to compute_dtype.
    """
    N, C_in, H, W = x.shape
    kh, kw = kernel_size
    sh, sw = stride
    ph, pw = padding
    dh, dw = dilation
    K = kh * kw
    dg = deformable_groups
    cpdg = C_in // dg
    cig = C_in // groups

    Ho = (H + 2 * ph - (dh * (kh - 1) + 1)) // sh + 1
    Wo = (W + 2 * pw - (dw * (kw - 1) + 1)) // sw + 1
    P = Ho * Wo

    # Offset channels per deformable group follow the mmcv modulated-deform-conv
    # convention: channel 2*t = dh of tap t, 2*t + 1 = dw of tap t.
    off = offset.reshape(N, dg, K, 2, P).astype(jnp.float32)
    msk = mask.reshape(N, dg, K, P).astype(jnp.float32)

    ti, tj = jnp.meshgrid(jnp.arange(kh), jnp.arange(kw), indexing="ij")
    tap_h = (ti * dh).reshape(K)
    tap_w = (tj * dw).reshape(K)
    oh, ow = jnp.meshgrid(jnp.arange(Ho), jnp.arange(Wo), indexing="ij")
    base_h = (oh * sh - ph).reshape(P)
    base_w = (ow * sw - pw).reshape(P)

    p_h = (base_h[None, :] + tap_h[:, None]).astype(jnp.float32)   # (K, P)
    p_w = (base_w[None, :] + tap_w[:, None]).astype(jnp.float32)
    p_h = p_h[None, None] + off[:, :, :, 0]                        # (N, dg, K, P)
    p_w = p_w[None, None] + off[:, :, :, 1]

    h0 = jnp.floor(p_h)
    w0 = jnp.floor(p_w)
    lh = p_h - h0
    lw = p_w - w0
    h0i = h0.astype(jnp.int32)
    w0i = w0.astype(jnp.int32)

    # gather source in the compute dtype (halves gathered-value traffic for bf16)
    xg = x.reshape(N, dg, cpdg, H * W).astype(compute_dtype)

    acc = None
    for ch in (0, 1):
        for cw in (0, 1):
            hi = h0i + ch
            wi = w0i + cw
            wgt_h = lh if ch else 1.0 - lh
            wgt_w = lw if cw else 1.0 - lw
            inb = (hi >= 0) & (hi < H) & (wi >= 0) & (wi < W)
            # fold bilinear weight, OOB zeroing and the modulation mask here
            wgt = jnp.where(inb, wgt_h * wgt_w, 0.0) * msk          # (N, dg, K, P) f32
            flat = jnp.clip(hi, 0, H - 1) * W + jnp.clip(wi, 0, W - 1)
            # TODO(synk): the data-dependent gather itself has no clean
            # Pallas/TPU equivalent; done here with XLA take_along_axis.
            idx = flat.reshape(N, dg, 1, K * P)                      # broadcast over cpdg
            v = jnp.take_along_axis(xg, idx, axis=3)                 # (N, dg, cpdg, K*P)
            v = v.reshape(N, dg, cpdg, K, P) * wgt[:, :, None]       # f32
            acc = v if acc is None else acc + v                      # pre-sum corners (f32)

    V = acc.reshape(N, groups, cig * K, P)
    pad_k = cig_k_pad - cig * K
    pad_p = p_pad - P
    if pad_k or pad_p:
        V = jnp.pad(V, ((0, 0), (0, 0), (0, pad_k), (0, pad_p)))
    return V.astype(compute_dtype)


# --------------------------------------------------------------------------
# Modulated deformable conv (forward), Pallas-accelerated
# --------------------------------------------------------------------------
def modulated_deform_conv2d(x, offset, mask, weight, bias=None, stride=1,
                            padding=0, dilation=1, groups=1,
                            deformable_groups=1,
                            compute_dtype=jnp.bfloat16):
    stride = _pair(stride)
    padding = _pair(padding)
    dilation = _pair(dilation)

    N, C_in, H, W = x.shape
    C_out, C_in_g, kh, kw = weight.shape
    assert C_in % groups == 0 and C_out % groups == 0
    assert C_in // groups == C_in_g
    assert C_in % deformable_groups == 0
    K = kh * kw
    cig_k = C_in_g * K
    cog = C_out // groups

    sh, sw = stride
    ph, pw = padding
    dh, dw = dilation
    Ho = (H + 2 * ph - (dh * (kh - 1) + 1)) // sh + 1
    Wo = (W + 2 * pw - (dw * (kw - 1) + 1)) // sw + 1
    P = Ho * Wo
    assert offset.shape == (N, deformable_groups * 2 * K, Ho, Wo)
    assert mask.shape == (N, deformable_groups * K, Ho, Wo)

    itemsize = jnp.dtype(compute_dtype).itemsize
    sublane = 32 // itemsize                      # 8 for f32, 16 for bf16
    cig_k_pad = _round_up(cig_k, sublane)
    capacity = _vmem_capacity_bytes()
    tile_p = _choose_tile_p(P, cig_k_pad, cog, itemsize, capacity)
    p_pad = _round_up(P, tile_p)

    V = _build_weighted_columns(
        x, offset, mask, (kh, kw), stride, padding, dilation,
        groups, deformable_groups, cig_k_pad, p_pad, compute_dtype)

    w3 = weight.reshape(groups, cog, cig_k).astype(jnp.float32)
    w3 = jnp.pad(w3, ((0, 0), (0, 0), (0, cig_k_pad - cig_k)))
    w3 = w3.astype(compute_dtype)
    b_arr = bias if bias is not None else jnp.zeros((C_out,), jnp.float32)
    b3 = b_arr.reshape(groups, cog, 1).astype(jnp.float32)

    grid = (N, groups, p_pad // tile_p)
    vmem_limit = _vmem_limit_bytes(tile_p, cig_k_pad, cog, itemsize, capacity)

    out = pl.pallas_call(
        _mdcn_kernel,
        out_shape=jax.ShapeDtypeStruct((N, groups, cog, p_pad), jnp.float32),
        grid=grid,
        in_specs=[
            pl.BlockSpec((1, 1, cig_k_pad, tile_p),
                         lambda n, g, p: (n, g, 0, p)),
            pl.BlockSpec((1, cog, cig_k_pad), lambda n, g, p: (g, 0, 0)),
            pl.BlockSpec((1, cog, 1), lambda n, g, p: (g, 0, 0)),
        ],
        out_specs=pl.BlockSpec((1, 1, cog, tile_p),
                               lambda n, g, p: (n, g, 0, p)),
        compiler_params=pltpu.CompilerParams(
            dimension_semantics=("parallel", "parallel", "parallel"),
            vmem_limit_bytes=vmem_limit),
    )(V, w3, b3)

    out = out.reshape(N, C_out, p_pad)
    if p_pad != P:
        out = out[:, :, :P]
    return out.reshape(N, C_out, Ho, Wo)


# --------------------------------------------------------------------------
# Independent pure-JAX reference (per-tap loop, no shared im2col code)
# --------------------------------------------------------------------------
def modulated_deform_conv2d_ref(x, offset, mask, weight, bias=None, stride=1,
                                padding=0, dilation=1, groups=1,
                                deformable_groups=1):
    stride = _pair(stride)
    padding = _pair(padding)
    dilation = _pair(dilation)
    N, C_in, H, W = x.shape
    C_out, C_in_g, kh, kw = weight.shape
    sh, sw = stride
    ph, pw = padding
    dh, dw = dilation
    K = kh * kw
    dg = deformable_groups
    cpdg = C_in // dg
    Ho = (H + 2 * ph - (dh * (kh - 1) + 1)) // sh + 1
    Wo = (W + 2 * pw - (dw * (kw - 1) + 1)) // sw + 1

    off = offset.reshape(N, dg, K, 2, Ho, Wo).astype(jnp.float32)
    msk = mask.reshape(N, dg, K, Ho, Wo).astype(jnp.float32)
    xf = x.astype(jnp.float32).reshape(N, dg, cpdg, H * W)

    base_h = (jnp.arange(Ho) * sh - ph).astype(jnp.float32)[:, None]
    base_w = (jnp.arange(Wo) * sw - pw).astype(jnp.float32)[None, :]

    cols = []
    for t in range(K):
        i, j = t // kw, t % kw
        p_h = base_h[None, None] + i * dh + off[:, :, t, 0]   # (N, dg, Ho, Wo)
        p_w = base_w[None, None] + j * dw + off[:, :, t, 1]
        h0 = jnp.floor(p_h)
        w0 = jnp.floor(p_w)
        lh = p_h - h0
        lw = p_w - w0
        h0 = h0.astype(jnp.int32)
        w0 = w0.astype(jnp.int32)
        val = jnp.zeros((N, dg, cpdg, Ho, Wo), jnp.float32)
        for ci in (0, 1):
            for cj in (0, 1):
                hi = h0 + ci
                wi = w0 + cj
                wgt = (lh if ci else 1.0 - lh) * (lw if cj else 1.0 - lw)
                ok = (hi >= 0) & (hi < H) & (wi >= 0) & (wi < W)
                fl = jnp.clip(hi, 0, H - 1) * W + jnp.clip(wi, 0, W - 1)
                idx = jnp.broadcast_to(fl.reshape(N, dg, 1, Ho * Wo),
                                       (N, dg, cpdg, Ho * Wo))
                v = jnp.take_along_axis(xf, idx, axis=3).reshape(
                    N, dg, cpdg, Ho, Wo)
                val = val + v * jnp.where(ok, wgt, 0.0)[:, :, None]
        cols.append((val * msk[:, :, t][:, :, None]).reshape(N, C_in, Ho, Wo))

    col = jnp.stack(cols, axis=2).reshape(N, groups, C_in_g, K, Ho * Wo)
    w4 = weight.reshape(groups, C_out // groups, C_in_g, K).astype(jnp.float32)
    out = jnp.einsum("gock,ngckp->ngop", w4, col).reshape(N, C_out, Ho, Wo)
    if bias is not None:
        out = out + bias.reshape(1, C_out, 1, 1)
    return out


# --------------------------------------------------------------------------
# Module wrapper mirroring ModulatedDeformConvPack3D
# --------------------------------------------------------------------------
class ModulatedDeformConvPack3D:
    """JAX port of the RODNet ModulatedDeformConvPack3D forward pass.

    Offsets and the modulation mask come from an internal zero-initialised
    conv (`conv_offset`, plain XLA conv), exactly as in the PyTorch module;
    the modulated deformable conv itself is Pallas-accelerated.
    """

    def __init__(self, in_channels, out_channels, kernel_size, stride=1,
                 padding=0, dilation=1, groups=1, deformable_groups=1,
                 bias=True, *, key, compute_dtype=jnp.bfloat16):
        assert in_channels % groups == 0 and out_channels % groups == 0
        self.in_channels = in_channels
        self.out_channels = out_channels
        self.kernel_size = _pair(kernel_size)
        self.stride = _pair(stride)
        self.padding = _pair(padding)
        self.dilation = _pair(dilation)
        self.groups = groups
        self.deformable_groups = deformable_groups
        self.compute_dtype = compute_dtype

        kh, kw = self.kernel_size
        n = in_channels * kh * kw
        stdv = 1.0 / math.sqrt(n)
        self.weight = jax.random.uniform(
            key, (out_channels, in_channels // groups, kh, kw),
            minval=-stdv, maxval=stdv, dtype=jnp.float32)
        self.bias = jnp.zeros((out_channels,), jnp.float32) if bias else None

        # conv_offset: Conv2d(in, dg*3*kh*kw), zero-initialised (init_offset()).
        off_ch = deformable_groups * 3 * kh * kw
        self.conv_offset_weight = jnp.zeros((off_ch, in_channels, kh, kw),
                                            jnp.float32)
        self.conv_offset_bias = jnp.zeros((off_ch,), jnp.float32)

    def _conv_offset(self, x):
        ph, pw = self.padding
        out = jax.lax.conv_general_dilated(
            x, self.conv_offset_weight,
            window_strides=self.stride,
            padding=[(ph, ph), (pw, pw)],
            rhs_dilation=self.dilation,
            dimension_numbers=("NCHW", "OIHW", "NCHW"))
        return out + self.conv_offset_bias.reshape(1, -1, 1, 1)

    def __call__(self, x):
        out = self._conv_offset(x)
        o1, o2, m = jnp.split(out, 3, axis=1)
        offset = jnp.concatenate([o1, o2], axis=1)
        mask = jax.nn.sigmoid(m)
        return modulated_deform_conv2d(
            x, offset, mask, self.weight, self.bias, self.stride,
            self.padding, self.dilation, self.groups, self.deformable_groups,
            compute_dtype=self.compute_dtype)


if __name__ == "__main__":
    key = jax.random.PRNGKey(0)
    k_w, k_x, k_off, k_msk = jax.random.split(key, 4)

    N, C_in, C_out = 2, 4, 8
    H, W = 16, 16
    ks, dg = 3, 1
    K = ks * ks

    mod = ModulatedDeformConvPack3D(C_in, C_out, ks, stride=1, padding=1,
                                    dilation=1, groups=1, deformable_groups=dg,
                                    bias=True, key=k_w)
    x = jax.random.normal(k_x, (N, C_in, H, W), dtype=jnp.float32)

    # 1) Full module forward. conv_offset is zero-initialised, so offsets are 0
    #    and mask = sigmoid(0) = 0.5 -> output == 0.5 * conv2d(x, W) + b.
    out = jax.block_until_ready(mod(x))
    assert out.shape == (N, C_out, H, W), out.shape
    ref_conv = 0.5 * jax.lax.conv_general_dilated(
        x, mod.weight, (1, 1), [(1, 1), (1, 1)],
        dimension_numbers=("NCHW", "OIHW", "NCHW")) \
        + mod.bias.reshape(1, -1, 1, 1)
    assert jnp.allclose(out, ref_conv, atol=5e-2, rtol=5e-2), \
        float(jnp.max(jnp.abs(out - ref_conv)))

    # 2) Random offsets / mask, f32 compute path vs. an independently written
    #    pure-JAX reference (tight tolerance: validates indexing / interp).
    offset = 0.7 * jax.random.normal(k_off, (N, dg * 2 * K, H, W), jnp.float32)
    mask = jax.nn.sigmoid(
        jax.random.normal(k_msk, (N, dg * K, H, W), jnp.float32))
    ref = modulated_deform_conv2d_ref(x, offset, mask, mod.weight, mod.bias,
                                      1, 1, 1, 1, dg)
    out_f32 = jax.block_until_ready(
        modulated_deform_conv2d(x, offset, mask, mod.weight, mod.bias,
                                1, 1, 1, 1, dg, compute_dtype=jnp.float32))
    assert out_f32.shape == ref.shape
    assert jnp.allclose(out_f32, ref, atol=2e-3, rtol=2e-3), \
        float(jnp.max(jnp.abs(out_f32 - ref)))

    # 3) Default bf16 MXU path (loose tolerance: only bf16 input rounding).
    out_bf16 = jax.block_until_ready(
        modulated_deform_conv2d(x, offset, mask, mod.weight, mod.bias,
                                1, 1, 1, 1, dg, compute_dtype=jnp.bfloat16))
    assert jnp.allclose(out_bf16, ref, atol=5e-2, rtol=5e-2), \
        float(jnp.max(jnp.abs(out_bf16 - ref)))

    print("KERNEL_OK")
</pallas_src>

<mosaic_0001>
module attributes {stable_mosaic.version = 11 : i64} {
  func.func @_mdcn_kernel(%arg0: i32, %arg1: i32, %arg2: i32, %arg3: memref<1x1x48x256xbf16, #tpu.memory_space<vmem>>, %arg4: memref<1x8x48xbf16, #tpu.memory_space<vmem>>, %arg5: memref<1x8x1xf32, #tpu.memory_space<vmem>>, %arg6: memref<1x1x8x256xf32, #tpu.memory_space<vmem>>) attributes {dimension_semantics = [#tpu.dimension_semantics<parallel>, #tpu.dimension_semantics<parallel>, #tpu.dimension_semantics<parallel>], iteration_bounds = array<i64: 2, 1, 1>, scalar_prefetch = 0 : i64, scratch_operands = 0 : i64, tpu.core_type = #tpu.core_type<tc>, window_params = [{transform_indices = @transform_0, window_bounds = array<i64: 1, 1, 48, 256>}, {transform_indices = @transform_1, window_bounds = array<i64: 1, 8, 48>}, {transform_indices = @transform_2, window_bounds = array<i64: 1, 8, 1>}, {transform_indices = @transform_3, window_bounds = array<i64: 1, 1, 8, 256>}]} {
    %c0 = arith.constant 0 : index
    %c0_0 = arith.constant 0 : index
    %c0_1 = arith.constant 0 : index
    %0 = vector.load %arg4[%c0, %c0_0, %c0_1] : memref<1x8x48xbf16, #tpu.memory_space<vmem>>, vector<1x8x48xbf16>
    %1 = vector.shape_cast %0 : vector<1x8x48xbf16> to vector<8x48xbf16>
    %c0_2 = arith.constant 0 : index
    %c0_3 = arith.constant 0 : index
    %c0_4 = arith.constant 0 : index
    %c0_5 = arith.constant 0 : index
    %2 = vector.load %arg3[%c0_2, %c0_3, %c0_4, %c0_5] : memref<1x1x48x256xbf16, #tpu.memory_space<vmem>>, vector<1x1x48x256xbf16>
    %3 = vector.shape_cast %2 : vector<1x1x48x256xbf16> to vector<48x256xbf16>
    %cst = arith.constant dense<0.000000e+00> : vector<8x256xf32>
    %4 = tpu.matmul %1, %3, %cst {dimension_numbers = #tpu.dot_dimension_numbers<[1], [0], [0], [1], [0, 0, 1, 1], [], []>} : vector<8x48xbf16>, vector<48x256xbf16>, vector<8x256xf32> -> vector<8x256xf32>
    %c0_6 = arith.constant 0 : index
    %c0_7 = arith.constant 0 : index
    %c0_8 = arith.constant 0 : index
    %5 = vector.load %arg5[%c0_6, %c0_7, %c0_8] : memref<1x8x1xf32, #tpu.memory_space<vmem>>, vector<1x8x1xf32>
    %6 = vector.shape_cast %5 : vector<1x8x1xf32> to vector<8x1xf32>
    %7 = vector.broadcast %6 : vector<8x1xf32> to vector<8x256xf32>
    %8 = arith.addf %4, %7 : vector<8x256xf32>
    %c0_9 = arith.constant 0 : index
    %c0_10 = arith.constant 0 : index
    %c0_11 = arith.constant 0 : index
    %c0_12 = arith.constant 0 : index
    %9 = vector.load %arg6[%c0_9, %c0_10, %c0_11, %c0_12] : memref<1x1x8x256xf32, #tpu.memory_space<vmem>>, vector<1x1x8x256xf32>
    %10 = vector.shape_cast %9 : vector<1x1x8x256xf32> to vector<8x256xf32>
    %11 = vector.shape_cast %8 : vector<8x256xf32> to vector<1x1x8x256xf32>
    tpu.vector_store %arg6[%c0_9, %c0_10, %c0_11, %c0_12], %11 {strides = array<i32>} : memref<1x1x8x256xf32, #tpu.memory_space<vmem>>, vector<1x1x8x256xf32>,
    return
  }
  func.func @transform_0(%arg0: i32, %arg1: i32, %arg2: i32) -> (i32, i32, i32, i32) {
    %c0_i32 = arith.constant 0 : i32
    %c0_i32_0 = arith.constant 0 : i32
    return %arg0, %arg1, %c0_i32, %arg2 : i32, i32, i32, i32
  }
  func.func @transform_1(%arg0: i32, %arg1: i32, %arg2: i32) -> (i32, i32, i32) {
    %c0_i32 = arith.constant 0 : i32
    %c0_i32_0 = arith.constant 0 : i32
    %c0_i32_1 = arith.constant 0 : i32
    return %arg1, %c0_i32, %c0_i32_0 : i32, i32, i32
  }
  func.func @transform_2(%arg0: i32, %arg1: i32, %arg2: i32) -> (i32, i32, i32) {
    %c0_i32 = arith.constant 0 : i32
    %c0_i32_0 = arith.constant 0 : i32
    %c0_i32_1 = arith.constant 0 : i32
    return %arg1, %c0_i32, %c0_i32_0 : i32, i32, i32
  }
  func.func @transform_3(%arg0: i32, %arg1: i32, %arg2: i32) -> (i32, i32, i32, i32) {
    %c0_i32 = arith.constant 0 : i32
    %c0_i32_0 = arith.constant 0 : i32
    return %arg0, %arg1, %c0_i32, %arg2 : i32, i32, i32, i32
  }
}

</mosaic_0001>

<llo_original>
// kernel: tpu_custom_call.1
$region0: #{tpu_custom_call.1}
  #allocation0 [shape = 'u32[]', space=smem, size = 0x4, offset = 0x4, fixed_abs, tag = 'smem constant byte address 0x4 - core index']
  #allocation1 [shape = 'u32[144,128]{1,0:T(1,128)}', space=vmem, size = 0x12000, scoped, tag = 'internal scratch']
  %s0 = inlined_call_operand.hbm [shape: bf16[2,1,48,256], index: 0, kind: input, shape index: {}]
  %s1 = inlined_call_operand.vmem [shape: bf16[1,8,48], index: 1, kind: input, shape index: {}]
  %s2 = inlined_call_operand.vmem [shape: f32[1,8,1], index: 2, kind: input, shape index: {}]
  %s3 = inlined_call_operand.hbm [shape: f32[2,1,8,256], index: 3, kind: output, shape index: {}]
  %s4 = sld [smem:[#allocation0]]
  $region49: #{tpu_custom_call.1} parent=0
    _
  %s6 = ssub.s32 1, %s4
  %s7 = scalar_select 0, %s6, %s4
  $region1: #{tpu_custom_call.1} parent=0
    #allocation2 [shape = 'u8[49152]{0}', space=vmem, size = 0xc000, scoped, tag = 'input window, operand 0']
    #allocation3 [shape = 's32[2]{0}', space=sflag, size = 0x8, scoped, tag = 'scoped memory for tpu_custom_call.1']
    #allocation4 [shape = 's32[2]{0}', space=sflag, size = 0x8, scoped, tag = 'scoped memory for tpu_custom_call.1']
    #allocation5 [shape = 'u8[16384]{0}', space=vmem, size = 0x4000, scoped, tag = 'output window, operand 0']
    %8 = vsyncpa [#allocation3], 0
    %s9 = scalar_lea.sflag [#allocation3], 1
    %10 = vsyncpa %s9, 0
    %11 = vsyncpa [#allocation4], 0
    %s12 = scalar_lea.sflag [#allocation4], 1
    %13 = vsyncpa %s12, 0
    loop: start=0, step=1, limit=4
    $region2: #{tpu_custom_call.1} parent=1 // loop_pre_header
      _
    $region3: #{tpu_custom_call.1} parent=1 // loop_header
      %s15 = sphi 0, %s19
      %p16 = scmp.ge.s32.totalorder %s15, 4
      %s22 = sphi 0, %s41
      %s23 = sphi 0, %s37
      %s24 = sphi 0, %s33
      %s25 = sphi 0, %s22
      %s26 = sphi 0, %s23
      %s27 = sphi 0, %s24
      %s28 = sphi 0, %s25
      %s29 = sphi 0, %s26
      %s30 = sphi 0, %s27
      %s48 = sphi 0, %s50
      %s51 = sphi 0, %s48
      %s52 = sphi 0, %s51
      %s68 = sphi 0, %s52
      %s74 = sphi 0, %s76
      %s77 = sphi 0, %s74
      %s78 = sphi 0, %s77
      %s94 = sphi 0, %s78
      %s100 = sphi 0, %s102
      %s103 = sphi 0, %s100
      %s104 = sphi 0, %s103
      %s120 = sphi 0, %s104
      %s130 = sphi 0, %s132
      %s133 = sphi 0, %s130
      %s134 = sphi 0, %s133
      %s150 = sphi 0, %s134
    $region4: #{tpu_custom_call.1} parent=1 // loop_header_branch
      %18 = sbr.rel (%p16) target = $region8
    $region5: #{tpu_custom_call.1} parent=1 // loop_body
      %s20 = ssub.s32 %s15, 1
      %s21 = ssub.s32 %s15, 2
      %s31 = sadd.s32 1, %s24
      %p32 = scmp.ge.s32.totalorder %s31, 1
      %s33 = scalar_select %p32, 0, %s31
      %s34 = sadd.s32 1, %s23
      %s35 = scalar_select %p32, %s34, %s23
      %p36 = scmp.ge.s32.totalorder %s35, 1
      %s37 = scalar_select %p36, 0, %s35
      %s38 = sadd.s32 1, %s22
      %s39 = scalar_select %p36, %s38, %s22
      %p40 = scmp.ge.s32.totalorder %s39, 2
      %s41 = scalar_select %p40, 0, %s39
      %s42 = ssub.s32 %s22, %s41
      %s43 = ssub.s32 %s23, %s37
      %s44 = sor.u32 %s42, %s43
      %s45 = ssub.s32 %s24, %s33
      %s46 = sor.u32 %s44, %s45
      %p47 = scmp.eq.s32.totalorder %s46, 0
      %s49 = sadd.s32 %s48, 1
      %s50 = scalar_select %p47, %s48, %s49
      %p53 = pneg %p47
      %p54 = scmp.eq.s32.totalorder %s15, 1
      %p55 = por %p53, %p54
      %p56 = scmp.ne.s32.totalorder %s48, %s51
      %p57 = scmp.eq.s32.totalorder %s15, 0
      %p58 = por %p56, %p57
      %p59 = scmp.ne.s32.totalorder %s48, %s51
      %p60 = scmp.eq.s32.totalorder %s20, 1
      %p61 = por %p59, %p60
      %p62 = scmp.ne.s32.totalorder %s51, %s52
      %p63 = scmp.eq.s32.totalorder %s20, 0
      %p64 = por %p62, %p63
      %p65 = scmp.ne.s32.totalorder %s51, %s52
      %p66 = scmp.eq.s32.totalorder %s21, 1
      %p67 = por %p65, %p66
      %p69 = scmp.ne.s32.totalorder %s52, %s68
      %p70 = scmp.eq.s32.totalorder %s21, 0
      %p71 = por %p69, %p70
      %s72 = ssub.s32 %s23, %s37
      %p73 = scmp.eq.s32.totalorder %s72, 0
      %s75 = sadd.s32 %s74, 1
      %s76 = scalar_select %p73, %s74, %s75
      %p79 = pneg %p73
      %p80 = scmp.eq.s32.totalorder %s15, 1
      %p81 = por %p79, %p80
      %p82 = scmp.ne.s32.totalorder %s74, %s77
      %p83 = scmp.eq.s32.totalorder %s15, 0
      %p84 = por %p82, %p83
      %p85 = scmp.ne.s32.totalorder %s74, %s77
      %p86 = scmp.eq.s32.totalorder %s20, 1
      %p87 = por %p85, %p86
      %p88 = scmp.ne.s32.totalorder %s77, %s78
      %p89 = scmp.eq.s32.totalorder %s20, 0
      %p90 = por %p88, %p89
      %p91 = scmp.ne.s32.totalorder %s77, %s78
      %p92 = scmp.eq.s32.totalorder %s21, 1
      %p93 = por %p91, %p92
      %p95 = scmp.ne.s32.totalorder %s78, %s94
      %p96 = scmp.eq.s32.totalorder %s21, 0
      %p97 = por %p95, %p96
      %s98 = ssub.s32 %s23, %s37
      %p99 = scmp.eq.s32.totalorder %s98, 0
      %s101 = sadd.s32 %s100, 1
      %s102 = scalar_select %p99, %s100, %s101
      %p105 = pneg %p99
      %p106 = scmp.eq.s32.totalorder %s15, 1
      %p107 = por %p105, %p106
      %p108 = scmp.ne.s32.totalorder %s100, %s103
      %p109 = scmp.eq.s32.totalorder %s15, 0
      %p110 = por %p108, %p109
      %p111 = scmp.ne.s32.totalorder %s100, %s103
      %p112 = scmp.eq.s32.totalorder %s20, 1
      %p113 = por %p111, %p112
      %p114 = scmp.ne.s32.totalorder %s103, %s104
      %p115 = scmp.eq.s32.totalorder %s20, 0
      %p116 = por %p114, %p115
      %p117 = scmp.ne.s32.totalorder %s103, %s104
      %p118 = scmp.eq.s32.totalorder %s21, 1
      %p119 = por %p117, %p118
      %p121 = scmp.ne.s32.totalorder %s104, %s120
      %p122 = scmp.eq.s32.totalorder %s21, 0
      %p123 = por %p121, %p122
      %s124 = ssub.s32 %s22, %s41
      %s125 = ssub.s32 %s23, %s37
      %s126 = sor.u32 %s124, %s125
      %s127 = ssub.s32 %s24, %s33
      %s128 = sor.u32 %s126, %s127
      %p129 = scmp.eq.s32.totalorder %s128, 0
      %s131 = sadd.s32 %s130, 1
      %s132 = scalar_select %p129, %s130, %s131
      %p135 = pneg %p129
      %p136 = scmp.eq.s32.totalorder %s15, 1
      %p137 = por %p135, %p136
      %p138 = scmp.ne.s32.totalorder %s130, %s133
      %p139 = scmp.eq.s32.totalorder %s15, 0
      %p140 = por %p138, %p139
      %p141 = scmp.ne.s32.totalorder %s130, %s133
      %p142 = scmp.eq.s32.totalorder %s20, 1
      %p143 = por %p141, %p142
      %p144 = scmp.ne.s32.totalorder %s133, %s134
      %p145 = scmp.eq.s32.totalorder %s20, 0
      %p146 = por %p144, %p145
      %p147 = scmp.ne.s32.totalorder %s133, %s134
      %p148 = scmp.eq.s32.totalorder %s21, 1
      %p149 = por %p147, %p148
      %p151 = scmp.ne.s32.totalorder %s134, %s150
      %p152 = scmp.eq.s32.totalorder %s21, 0
      %p153 = por %p151, %p152
      %p154 = scmp.le.s32.totalorder 1, %s15
      %p155 = scmp.lt.s32.totalorder %s15, 3
      %p156 = pnand %p154, %p155
      %p157 = pneg %p156
      // Predicated region
      $region9: #{tpu_custom_call.1} parent=5 // pred_check
        _
      $region10: #{tpu_custom_call.1} parent=5 // pred_check_branch
        %159 = sbr.rel (%p156) target = $region12
      $region11: #{tpu_custom_call.1} parent=5 // pred_region
        %s160 = ssub.s32 %s15, 1
        // Predicated region
        $region13: #{tpu_custom_call.1} parent=11 // pred_check
          %p161 = pneg %p90
        $region14: #{tpu_custom_call.1} parent=11 // pred_check_branch
          %163 = sbr.rel (%p161) target = $region16
        $region15: #{tpu_custom_call.1} parent=11 // pred_region
          %p164 = scmp.lt.s32.totalorder %s26, 0
          %s165 = scalar_select %p164, %s26, 0
          %s166 = smul.addr %s165, 4
          %s167 = scalar_lea.vmem %s1, %s166
        $region16: #{tpu_custom_call.1} parent=11 // pred_fallthru
          _
        // Predicated region
        $region17: #{tpu_custom_call.1} parent=11 // pred_check
          %p168 = pneg %p116
        $region18: #{tpu_custom_call.1} parent=11 // pred_check_branch
          %170 = sbr.rel (%p168) target = $region20
        $region19: #{tpu_custom_call.1} parent=11 // pred_region
          %p171 = scmp.lt.s32.totalorder %s26, 0
          %s172 = scalar_select %p171, %s26, 0
          %s173 = smul.addr %s172, 8
          %s174 = scalar_lea.vmem %s2, %s173
        $region20: #{tpu_custom_call.1} parent=11 // pred_fallthru
          _
      $region12: #{tpu_custom_call.1} parent=5 // pred_fallthru
        _
      %p175 = scmp.lt.s32.totalorder %s15, 2
      // Predicated region
      $region21: #{tpu_custom_call.1} parent=5 // pred_check
        %p176 = pneg %p175
      $region22: #{tpu_custom_call.1} parent=5 // pred_check_branch
        %178 = sbr.rel (%p176) target = $region24
      $region23: #{tpu_custom_call.1} parent=5 // pred_region
        // Predicated region
        $region25: #{tpu_custom_call.1} parent=23 // pred_check
          %p179 = pneg %p58
        $region26: #{tpu_custom_call.1} parent=23 // pred_check_branch
          %181 = sbr.rel (%p179) target = $region28
        $region27: #{tpu_custom_call.1} parent=23 // pred_region
          %s182 = sand.u32 %s48, 1
          %s183 = scalar_lea.sflag [#allocation3], %s182
          %s184 = sand.u32 %s48, 1
          %s185 = smul.addr %s184, 48
          %s186 = scalar_lea.vmem [#allocation2], %s185
          %s187 = smul.u32 2, %s24
          %s189 = ssub.s32 768, 768
          %190 = vsyncadd %s183, %s189
          %s191 = smul.addr %s23, 12
          %s192 = sadd.s32 %s187, %s191
          %s193 = smul.addr %s22, 12
          %s194 = sadd.s32 %s192, %s193
          %s195 = smul.addr %s194, 64
          %s196 = scalar_lea.hbm %s0, %s195
          %s197 = sshll.u32 %s186, 4
          %s198 = int_to_ptr.vmem [resolvable:$true] %s197
          %203 = dma.hbm_to_vmem [thread:$0]  %s196, 768, %s198, %s183, 128, 128, 8
        $region28: #{tpu_custom_call.1} parent=23 // pred_fallthru
          _
      $region24: #{tpu_custom_call.1} parent=5 // pred_fallthru
        _
      %p204 = scmp.le.s32.totalorder 1, %s15
      %p205 = scmp.lt.s32.totalorder %s15, 3
      %p206 = pnand %p204, %p205
      %p207 = pneg %p206
      // Predicated region
      $region29: #{tpu_custom_call.1} parent=5 // pred_check
        _
      $region30: #{tpu_custom_call.1} parent=5 // pred_check_branch
        %209 = sbr.rel (%p206) target = $region32
      $region31: #{tpu_custom_call.1} parent=5 // pred_region
        %s210 = ssub.s32 %s15, 1
        %s211 = sand.u32 %s51, 1
        %s212 = scalar_lea.sflag [#allocation3], %s211
        %s213 = sand.u32 %s51, 1
        %s214 = smul.addr %s213, 48
        %s215 = scalar_lea.vmem [#allocation2], %s214
        // Predicated region
        $region33: #{tpu_custom_call.1} parent=31 // pred_check
          %p216 = pneg %p64
        $region34: #{tpu_custom_call.1} parent=31 // pred_check_branch
          %218 = sbr.rel (%p216) target = $region36
        $region35: #{tpu_custom_call.1} parent=31 // pred_region
          %219 = dma.done %s212, 768
        $region36: #{tpu_custom_call.1} parent=31 // pred_fallthru
          _
        %s220 = sand.u32 %s51, 1
        %s221 = scalar_lea.sflag [#allocation3], %s220
        %s222 = sand.u32 %s51, 1
        %s223 = smul.addr %s222, 48
        %s224 = scalar_lea.vmem [#allocation2], %s223
        %p225 = pneg %p64
        %p226 = pneg %p61
        %p227 = scmp.lt.s32.totalorder %s26, 0
        %s228 = scalar_select %p227, %s26, 0
        %s229 = smul.addr %s228, 4
        %s230 = scalar_lea.vmem %s1, %s229
        %p231 = pneg %p90
        %p232 = pneg %p87
        %p233 = scmp.lt.s32.totalorder %s26, 0
        %s234 = scalar_select %p233, %s26, 0
        %s235 = smul.addr %s234, 8
        %s236 = scalar_lea.vmem %s2, %s235
        %p237 = pneg %p116
        %p238 = pneg %p113
        %p239 = pneg %p146
        %p240 = pneg %p143
        %s241 = sand.u32 %s133, 1
        %s242 = scalar_lea.sflag [#allocation4], %s241
        %s243 = sand.u32 %s133, 1
        %s244 = smul.addr %s243, 16
        %s245 = scalar_lea.vmem [#allocation5], %s244
        %s246 = smul.u32 2, %s27
        %p247 = scmp.lt.s32.totalorder %s26, 0
        %s248 = scalar_select %p247, %s26, 0
        %s249 = smul.addr %s248, 4
        %s250 = scalar_lea.vmem %s1, %s249
        %p251 = scmp.lt.s32.totalorder %s26, 0
        %s252 = scalar_select %p251, %s26, 0
        %s253 = smul.addr %s252, 8
        %s254 = scalar_lea.vmem %s2, %s253
        %s255 = smul.u32 2, %s27
        %v257 = vld [vmem:[%s250] sm:$0xf]
        %v258 = vld [vmem:[%s215] sm:$0xff]
        %v259 = vld [vmem:[%s215 + $0x8] sm:$0xff]
        %v260 = vld [vmem:[%s215 + $0x10] sm:$0xff]
        %v261 = vld [vmem:[%s215 + $0x18] sm:$0xff]
        %v262 = vld [vmem:[%s215 + $0x20] sm:$0xff]
        %v263 = vld [vmem:[%s215 + $0x28] sm:$0xff]
        %v264 = vld [vmem:[%s254] sm:$0xff]
        %266 = vset.pattern.permute.xlu0 0
        %267 = vperm.xlu0 %266, %v264
        %v268 = vpop.permute.xlu0 %267
        %v276 = vunpack.c.l.b16 %v258
        %v277 = vunpack.c.h.b16 %v258
        %v278 = vunpack.c.l.b16 %v259
        %v279 = vunpack.c.h.b16 %v259
        %v280 = vunpack.c.l.b16 %v260
        %v281 = vunpack.c.h.b16 %v260
        %v282 = vunpack.c.l.b16 %v261
        %v283 = vunpack.c.h.b16 %v261
        %v284 = vunpack.c.l.b16 %v262
        %v285 = vunpack.c.h.b16 %v262
        %v286 = vunpack.c.l.b16 %v263
        %v287 = vunpack.c.h.b16 %v263
        %v288 = vpack.c.b16 %v278, %v276
        %v289 = vpack.c.b16 %v279, %v277
        %v290 = vpack.c.b16 %v282, %v280
        %v291 = vpack.c.b16 %v283, %v281
        %v292 = vpack.c.b16 %v286, %v284
        %v293 = vpack.c.b16 %v287, %v285
        %vm300 = vcmask 392192
        %v302 = vsel %vm300, %v257, 0
        %304 = vmatprep.subr.bf16.mxu0 %v289
        %305 = vmatpush1.bf16.msra.mxu0 %v288
        %306 = vmatprep.subr.bf16.mxu0 %v291
        %307 = vmatpush1.bf16.msra.mxu0 %v290
        %308 = vmatprep.subr.bf16.mxu0 %v293
        %309 = vmatpush1.bf16.msra.mxu0 %v292
        %310 = vmatprep.subr.bf16.mxu0 0
        %311 = vmatpush1.bf16.msra.mxu0 0
        %312 = vmatprep.subr.bf16.mxu0 0
        %313 = vmatpush1.bf16.msra.mxu0 0
        %314 = vmatprep.subr.bf16.mxu0 0
        %315 = vmatpush1.bf16.msra.mxu0 0
        %316 = vmatprep.subr.bf16.mxu0 0
        %317 = vmatpush1.bf16.msra.mxu0 0
        %318 = vmatprep.subr.bf16.mxu0 0
        %319 = vmatpush1.bf16.msra.mxu0 0
        %320 = vmatprep.subr.bf16.mxu0 0
        %321 = vmatpush1.bf16.msra.mxu0 0
        %322 = vmatprep.subr.bf16.mxu0 0
        %323 = vmatpush1.bf16.msra.mxu0 0
        %324 = vmatprep.subr.bf16.mxu0 0
        %325 = vmatpush1.bf16.msra.mxu0 0
        %326 = vmatprep.subr.bf16.mxu0 0
        %327 = vmatpush1.bf16.msra.mxu0 0
        %328 = vmatprep.subr.bf16.mxu0 0
        %329 = vmatpush1.bf16.msra.mxu0 0
        %330 = vmatprep.subr.bf16.mxu0 0
        %331 = vmatpush1.bf16.msra.mxu0 0
        %332 = vmatprep.subr.bf16.mxu0 0
        %333 = vmatpush1.bf16.msra.mxu0 0
        %334 = vmatprep.subr.bf16.mxu0 0
        %335 = vmatpush1.bf16.msra.mxu0 0
        %336 = vmatprep.mubr.bf16.mxu0 0
        %337 = vmatmul.mubr.bf16.gmra.mrb[0].mxu0 %v302
        %v338 = vpop.f32.mrb[0].mxu0
        %v339 = vadd.f32 %v268, %v338
        %v340 = vpop.f32.mrb[0].mxu0
        %v341 = vadd.f32 %v268, %v340
        %v342 = vpop.f32.mrb[0].mxu0
        %v343 = vpop.f32.mrb[0].mxu0
        %344 = vdwg.mxu0
        %345 = vst [vmem:[%s245] sm:$0xff] %v339
        %346 = vst [vmem:[%s245 + $0x8] sm:$0xff] %v341
        %s347 = sand.u32 %s133, 1
        %s348 = scalar_lea.sflag [#allocation4], %s347
        %s349 = sand.u32 %s133, 1
        %s350 = smul.addr %s349, 16
        %s351 = scalar_lea.vmem [#allocation5], %s350
        // Predicated region
        $region37: #{tpu_custom_call.1} parent=31 // pred_check
          %p352 = pneg %p143
        $region38: #{tpu_custom_call.1} parent=31 // pred_check_branch
          %354 = sbr.rel (%p352) target = $region40
        $region39: #{tpu_custom_call.1} parent=31 // pred_region
          %s355 = smul.u32 2, %s27
          %s357 = ssub.s32 256, 256
          %358 = vsyncadd %s348, %s357
          %s359 = smul.addr %s26, 2
          %s360 = sadd.s32 %s355, %s359
          %s361 = smul.addr %s25, 2
          %s362 = sadd.s32 %s360, %s361
          %s363 = smul.addr %s362, 128
          %s364 = scalar_lea.hbm %s3, %s363
          %s366 = sshll.u32 %s351, 4
          %s367 = int_to_ptr.vmem [resolvable:$true] %s366
          %369 = dma.vmem_to_hbm [thread:$0]  %s367, 256, %s364, %s348
        $region40: #{tpu_custom_call.1} parent=31 // pred_fallthru
          _
      $region32: #{tpu_custom_call.1} parent=5 // pred_fallthru
        _
      %p370 = scmp.le.s32.totalorder 2, %s15
      // Predicated region
      $region41: #{tpu_custom_call.1} parent=5 // pred_check
        %p371 = pneg %p370
      $region42: #{tpu_custom_call.1} parent=5 // pred_check_branch
        %373 = sbr.rel (%p371) target = $region44
      $region43: #{tpu_custom_call.1} parent=5 // pred_region
        %s374 = ssub.s32 %s15, 2
        // Predicated region
        $region45: #{tpu_custom_call.1} parent=43 // pred_check
          %p375 = pneg %p149
        $region46: #{tpu_custom_call.1} parent=43 // pred_check_branch
          %377 = sbr.rel (%p375) target = $region48
        $region47: #{tpu_custom_call.1} parent=43 // pred_region
          %s378 = sand.u32 %s134, 1
          %s379 = scalar_lea.sflag [#allocation4], %s378
          %s380 = sand.u32 %s134, 1
          %s381 = smul.addr %s380, 16
          %s382 = scalar_lea.vmem [#allocation5], %s381
          %383 = dma.done %s379, 256
        $region48: #{tpu_custom_call.1} parent=43 // pred_fallthru
          _
      $region44: #{tpu_custom_call.1} parent=5 // pred_fallthru
        _
    $region6: #{tpu_custom_call.1} parent=1 // loop_footer
      %s19 = sadd.s32 1, %s15
    $region7: #{tpu_custom_call.1} parent=1 // loop_footer_branch
      %14 = sbr.rel target = $region3
    $region8: #{tpu_custom_call.1} parent=1 // loop_exit
      _
    %384 = vsyncpa [#allocation3], 1
    %s385 = scalar_lea.sflag [#allocation3], 1
    %386 = vsyncpa %s385, 1
    %387 = vsyncpa [#allocation4], 1
    %s388 = scalar_lea.sflag [#allocation4], 1
    %389 = vsyncpa %s388, 1

</llo_original>
